<compile_context>
chip_gen: v6e
topology: v6e:2x2x1
jax: 0.10.0
libtpu: 0.0.40
codegen_flags: <defaults>
</compile_context>

<pallas_src>
import functools

import jax
import jax.numpy as jnp
from jax.experimental import pallas as pl
from jax.experimental.pallas import tpu as pltpu


def _round_up(x, m):
    return ((x + m - 1) // m) * m


def _bf16_eup_ok():
    """bf16 VPU/EUP exists on v6e / v7x; keep f32 vector math elsewhere."""
    try:
        kind = jax.devices()[0].device_kind.lower()
    except Exception:
        return False
    return ("v6" in kind) or ("v7" in kind)


def _attention_kernel(enc_ref, hproj_ref, w_ref, v_ref, out_ref, logits_ref,
                      *, s_valid, s_tile, s_pad, tanh_dtype):
    # enc_ref:    (S_T, B_T, H)  bf16 encoder-output chunk
    # hproj_ref:  (B_T, H)       f32  precomputed hidden projection + bias
    # w_ref:      (H, H)         bf16 W_enc^T (in, out)
    # v_ref:      (1, H)         f32  v row
    # out_ref:    (S, B_T)       f32  softmax over the sequence axis
    # logits_ref: (S_pad, B_T)   f32  scratch accumulating per-chunk logits
    si = pl.program_id(1)
    n_s = pl.num_programs(1)
    s_t, b_t, h = enc_ref.shape

    # MXU: bf16 inputs, f32 accumulation.  (S_T*B_T, H) x (H, H).
    x = enc_ref[...].reshape(s_t * b_t, h)
    proj = jnp.dot(x, w_ref[...], preferred_element_type=jnp.float32)
    pre = proj.reshape(s_t, b_t, h) + hproj_ref[...][None, :, :]

    # EUP tanh (bf16 where supported); H->1 projection as VPU multiply +
    # cross-lane reduce, accumulated in f32 via the f32 v row broadcast.
    energy = jnp.tanh(pre.astype(tanh_dtype))
    chunk_logits = jnp.sum(energy * v_ref[...][None, :, :], axis=-1)   # (S_T, B_T) f32

    start = si * s_tile
    if s_tile % 8 == 0:
        start = pl.multiple_of(start, 8)
    logits_ref[pl.ds(start, s_tile), :] = chunk_logits

    # Softmax over the sequence axis, once per batch tile (last seq chunk).
    @pl.when(si == n_s - 1)
    def _():
        logits = logits_ref[...]                        # (S_pad, B_T)
        if s_pad > s_valid:                             # mask padded seq rows
            rows = jax.lax.broadcasted_iota(jnp.int32, logits.shape, 0)
            logits = jnp.where(rows < s_valid, logits, -jnp.inf)
        m = jnp.max(logits, axis=0, keepdims=True)
        e = jnp.exp(logits - m)
        denom = jnp.sum(e, axis=0, keepdims=True)
        probs = e * pl.reciprocal(denom, approx=True)
        out_ref[...] = probs[:s_valid, :].astype(out_ref.dtype)


def attention_forward(hidden, encoder_outputs, attn_w, attn_b, v_w,
                      *, batch_tile=None, seq_tile=None,
                      vmem_budget_bytes=20 * 1024 * 1024,
                      vmem_limit_bytes=32 * 1024 * 1024):
    """hidden: (1, B, H), encoder_outputs: (S, B, H).
    attn_w: (H, 2H) torch Linear weight, attn_b: (H,), v_w: (1, H)."""
    S, B, H = encoder_outputs.shape

    # Split the torch Linear(2H -> H) weight.
    w_hid = attn_w[:, :H]                    # acts on repeated hidden
    w_enc = attn_w[:, H:]                    # acts on encoder_outputs

    # Hidden projection is identical for every seq position -> one small matmul.
    h_proj = (jnp.dot(hidden[0], w_hid.T) + attn_b).astype(jnp.float32)   # (B, H)

    enc_bf16 = encoder_outputs.astype(jnp.bfloat16)
    w_enc_t = w_enc.T.astype(jnp.bfloat16)   # (H_in, H_out)
    v_row = v_w.reshape(1, H).astype(jnp.float32)

    # ---------------- batch tile ----------------
    if batch_tile is not None:
        bt = int(batch_tile)
    elif B <= 128:
        bt = B                               # full batch: no padded lanes
    else:
        # Lane-aligned, <= 256, and >= 2 batch steps so the "parallel" axis
        # actually feeds both TensorCores on v7x.
        bt = min(256, _round_up(pl.cdiv(B, 2), 128))
    n_b = pl.cdiv(B, bt)

    # -------- sequence tile from an explicit VMEM budget --------
    # Per enc-tile element: 2 B bf16 x2 (double buffer) + ~8 B f32 proj/energy
    # temporaries.  Fixed costs: weights, hidden projection, logits scratch,
    # resident f32 output block.
    per_elem = 12
    fixed = (2 * 2 * H * H                       # double-buffered bf16 W_enc^T
             + 2 * 4 * bt * H                    # double-buffered f32 hidden proj
             + 4 * H                             # v row
             + 4 * (_round_up(S, 8) + 8) * bt    # logits scratch (upper bound)
             + 2 * 4 * S * bt)                   # resident f32 output block
    avail = max(vmem_budget_bytes - fixed, per_elem * 8 * bt * H)
    if seq_tile is not None:
        s_t = int(seq_tile)
    else:
        s_t = max(8, (avail // (per_elem * bt * H)) // 8 * 8)
    s_t = min(s_t, _round_up(S, 8))
    if s_t >= S:
        s_t = S                                  # single chunk covers all of S
    n_s = pl.cdiv(S, s_t)
    s_pad = n_s * s_t                            # scratch rows (>= S)

    kernel = functools.partial(
        _attention_kernel,
        s_valid=S, s_tile=s_t, s_pad=s_pad,
        tanh_dtype=jnp.bfloat16 if _bf16_eup_ok() else jnp.float32)

    return pl.pallas_call(
        kernel,
        out_shape=jax.ShapeDtypeStruct((S, B), jnp.float32),
        grid_spec=pltpu.PrefetchScalarGridSpec(
            num_scalar_prefetch=0,
            grid=(n_b, n_s),
            in_specs=[
                pl.BlockSpec((s_t, bt, H), lambda bi, si: (si, bi, 0)),  # enc chunk
                pl.BlockSpec((bt, H), lambda bi, si: (bi, 0)),           # hidden proj
                pl.BlockSpec((H, H), lambda bi, si: (0, 0)),             # W_enc^T (resident)
                pl.BlockSpec((1, H), lambda bi, si: (0, 0)),             # v row (resident)
            ],
            out_specs=pl.BlockSpec((S, bt), lambda bi, si: (0, bi)),
            scratch_shapes=[pltpu.VMEM((s_pad, bt), jnp.float32)],
        ),
        compiler_params=pltpu.CompilerParams(
            dimension_semantics=("parallel", "arbitrary"),
            vmem_limit_bytes=vmem_limit_bytes,
        ),
    )(enc_bf16, h_proj, w_enc_t, v_row)


def reference_forward(hidden, encoder_outputs, attn_w, attn_b, v_w):
    """Pure-JAX f32 reference mirroring the PyTorch forward."""
    S, B, H = encoder_outputs.shape
    hidden_rep = jnp.broadcast_to(hidden, (S, B, H))
    cat = jnp.concatenate([hidden_rep, encoder_outputs], axis=2)
    energy = jnp.tanh(jnp.einsum("sbk,hk->sbh", cat, attn_w) + attn_b)
    attention = jnp.einsum("sbh,oh->sbo", energy, v_w)[..., 0]   # (S, B)
    return jax.nn.softmax(attention, axis=0)


if __name__ == "__main__":
    hidden_size = 32
    batch = 2
    seq_len = 8

    key = jax.random.PRNGKey(0)
    k1, k2, k3, k4, k5 = jax.random.split(key, 5)

    # torch nn.Linear default init: U[-1/sqrt(fan_in), 1/sqrt(fan_in)]
    bound_attn = 1.0 / jnp.sqrt(2.0 * hidden_size)
    attn_w = jax.random.uniform(k1, (hidden_size, 2 * hidden_size),
                                jnp.float32, -bound_attn, bound_attn)
    attn_b = jax.random.uniform(k2, (hidden_size,),
                                jnp.float32, -bound_attn, bound_attn)
    bound_v = 1.0 / jnp.sqrt(1.0 * hidden_size)
    v_w = jax.random.uniform(k3, (1, hidden_size), jnp.float32, -bound_v, bound_v)

    # Inputs: hidden (1, B, H), encoder_outputs (S, B, H)
    hidden = jax.random.normal(k4, (1, batch, hidden_size), jnp.float32)
    encoder_outputs = jax.random.normal(k5, (seq_len, batch, hidden_size), jnp.float32)

    out = attention_forward(hidden, encoder_outputs, attn_w, attn_b, v_w)
    out = jax.block_until_ready(out)

    ref = reference_forward(hidden, encoder_outputs, attn_w, attn_b, v_w)
    assert out.shape == (seq_len, batch)
    # bf16 MXU operands (f32 accumulation) + approx reciprocal -> loosened tolerance.
    assert jnp.allclose(out, ref, atol=2e-2, rtol=0.0), "mismatch vs pure-JAX reference"
    assert jnp.allclose(jnp.sum(out, axis=0), 1.0, atol=5e-3), "softmax columns must sum to ~1"

    print("KERNEL_OK")
</pallas_src>

<mosaic_0001>
module attributes {stable_mosaic.version = 11 : i64} {
  func.func @_attention_kernel(%arg0: i32, %arg1: i32, %arg2: memref<8x2x32xbf16, #tpu.memory_space<vmem>>, %arg3: memref<2x32xf32, #tpu.memory_space<vmem>>, %arg4: memref<32x32xbf16, #tpu.memory_space<vmem>>, %arg5: memref<1x32xf32, #tpu.memory_space<vmem>>, %arg6: memref<8x2xf32, #tpu.memory_space<vmem>>, %arg7: memref<8x2xf32, #tpu.memory_space<vmem>>) attributes {dimension_semantics = [#tpu.dimension_semantics<parallel>, #tpu.dimension_semantics<arbitrary>], iteration_bounds = array<i64: 1, 1>, scalar_prefetch = 0 : i64, scratch_operands = 1 : i64, tpu.core_type = #tpu.core_type<tc>, window_params = [{transform_indices = @transform_0, window_bounds = array<i64: 8, 2, 32>}, {transform_indices = @transform_1, window_bounds = array<i64: 2, 32>}, {pipeline_mode = #tpu.pipeline_mode<synchronous>, transform_indices = @transform_2, window_bounds = array<i64: 32, 32>}, {pipeline_mode = #tpu.pipeline_mode<synchronous>, transform_indices = @transform_3, window_bounds = array<i64: 1, 32>}, {transform_indices = @transform_4, window_bounds = array<i64: 8, 2>}]} {
    %c0 = arith.constant 0 : index
    %c0_0 = arith.constant 0 : index
    %c0_1 = arith.constant 0 : index
    %0 = vector.load %arg2[%c0, %c0_0, %c0_1] : memref<8x2x32xbf16, #tpu.memory_space<vmem>>, vector<8x2x32xbf16>
    %1 = vector.shape_cast %0 : vector<8x2x32xbf16> to vector<16x32xbf16>
    %c0_2 = arith.constant 0 : index
    %c0_3 = arith.constant 0 : index
    %2 = vector.load %arg4[%c0_2, %c0_3] : memref<32x32xbf16, #tpu.memory_space<vmem>>, vector<32x32xbf16>
    %cst = arith.constant dense<0.000000e+00> : vector<16x32xf32>
    %3 = tpu.matmul %1, %2, %cst {dimension_numbers = #tpu.dot_dimension_numbers<[1], [0], [0], [1], [0, 0, 1, 1], [], []>} : vector<16x32xbf16>, vector<32x32xbf16>, vector<16x32xf32> -> vector<16x32xf32>
    %4 = vector.shape_cast %3 : vector<16x32xf32> to vector<8x2x32xf32>
    %c0_4 = arith.constant 0 : index
    %c0_5 = arith.constant 0 : index
    %5 = vector.load %arg3[%c0_4, %c0_5] : memref<2x32xf32, #tpu.memory_space<vmem>>, vector<2x32xf32>
    %6 = vector.shape_cast %5 : vector<2x32xf32> to vector<1x2x32xf32>
    %7 = vector.broadcast %6 : vector<1x2x32xf32> to vector<8x2x32xf32>
    %8 = arith.addf %4, %7 : vector<8x2x32xf32>
    %9 = math.tanh %8 : vector<8x2x32xf32>
    %c0_6 = arith.constant 0 : index
    %c0_7 = arith.constant 0 : index
    %10 = vector.load %arg5[%c0_6, %c0_7] : memref<1x32xf32, #tpu.memory_space<vmem>>, vector<1x32xf32>
    %11 = vector.shape_cast %10 : vector<1x32xf32> to vector<1x1x32xf32>
    %12 = vector.broadcast %11 : vector<1x1x32xf32> to vector<8x2x32xf32>
    %13 = arith.mulf %9, %12 : vector<8x2x32xf32>
    %cst_8 = arith.constant dense<0.000000e+00> : vector<8x2xf32>
    %14 = vector.multi_reduction <add>, %13, %cst_8 [2] : vector<8x2x32xf32> to vector<8x2xf32>
    %c8_i32 = arith.constant 8 : i32
    %15 = arith.muli %arg1, %c8_i32 : i32
    %16 = tpu.assume_multiple %15, 8 : i32
    %17 = arith.index_cast %16 : i32 to index
    %c0_9 = arith.constant 0 : index
    %18 = vector.load %arg7[%17, %c0_9] : memref<8x2xf32, #tpu.memory_space<vmem>>, vector<8x2xf32>
    tpu.vector_store %arg7[%17, %c0_9], %14 {strides = array<i32>} : memref<8x2xf32, #tpu.memory_space<vmem>>, vector<8x2xf32>,
    %c0_i32 = arith.constant 0 : i32
    %19 = arith.cmpi eq, %arg1, %c0_i32 : i32
    %20 = arith.extui %19 : i1 to i32
    %c0_i32_10 = arith.constant 0 : i32
    %21 = arith.cmpi ne, %20, %c0_i32_10 : i32
    scf.if %21 {
      %c0_11 = arith.constant 0 : index
      %c0_12 = arith.constant 0 : index
      %22 = vector.load %arg7[%c0_11, %c0_12] : memref<8x2xf32, #tpu.memory_space<vmem>>, vector<8x2xf32>
      %cst_13 = arith.constant dense<0xFF800000> : vector<2xf32>
      %23 = vector.multi_reduction <maximumf>, %22, %cst_13 [0] : vector<8x2xf32> to vector<2xf32>
      %24 = vector.shape_cast %23 : vector<2xf32> to vector<1x2xf32>
      %25 = vector.broadcast %24 : vector<1x2xf32> to vector<8x2xf32>
      %26 = arith.subf %22, %25 : vector<8x2xf32>
      %27 = math.exp %26 : vector<8x2xf32>
      %cst_14 = arith.constant dense<0.000000e+00> : vector<2xf32>
      %28 = vector.multi_reduction <add>, %27, %cst_14 [0] : vector<8x2xf32> to vector<2xf32>
      %29 = vector.shape_cast %28 : vector<2xf32> to vector<1x2xf32>
      %30 = tpu.reciprocal %29 {approx = true} : vector<1x2xf32> -> vector<1x2xf32>
      %31 = vector.broadcast %30 : vector<1x2xf32> to vector<8x2xf32>
      %32 = arith.mulf %27, %31 : vector<8x2xf32>
      %c0_15 = arith.constant 0 : index
      %c0_16 = arith.constant 0 : index
      %33 = vector.load %arg6[%c0_15, %c0_16] : memref<8x2xf32, #tpu.memory_space<vmem>>, vector<8x2xf32>
      tpu.vector_store %arg6[%c0_15, %c0_16], %32 {strides = array<i32>} : memref<8x2xf32, #tpu.memory_space<vmem>>, vector<8x2xf32>,
    } else {
    }
    return
  }
  func.func @transform_0(%arg0: i32, %arg1: i32) -> (i32, i32, i32) {
    %c0_i32 = arith.constant 0 : i32
    %c0_i32_0 = arith.constant 0 : i32
    return %arg1, %arg0, %c0_i32 : i32, i32, i32
  }
  func.func @transform_1(%arg0: i32, %arg1: i32) -> (i32, i32) {
    %c0_i32 = arith.constant 0 : i32
    %c0_i32_0 = arith.constant 0 : i32
    return %arg0, %c0_i32 : i32, i32
  }
  func.func @transform_2(%arg0: i32, %arg1: i32) -> (i32, i32) {
    %c0_i32 = arith.constant 0 : i32
    %c0_i32_0 = arith.constant 0 : i32
    %c0_i32_1 = arith.constant 0 : i32
    return %c0_i32, %c0_i32_0 : i32, i32
  }
  func.func @transform_3(%arg0: i32, %arg1: i32) -> (i32, i32) {
    %c0_i32 = arith.constant 0 : i32
    %c0_i32_0 = arith.constant 0 : i32
    %c0_i32_1 = arith.constant 0 : i32
    return %c0_i32, %c0_i32_0 : i32, i32
  }
  func.func @transform_4(%arg0: i32, %arg1: i32) -> (i32, i32) {
    %c0_i32 = arith.constant 0 : i32
    %c0_i32_0 = arith.constant 0 : i32
    return %c0_i32, %arg0 : i32, i32
  }
}

</mosaic_0001>

<llo_original>
// kernel: tpu_custom_call.1
$region0: #{tpu_custom_call.1}
  #allocation0 [shape = 'u32[]', space=smem, size = 0x4, offset = 0x4, fixed_abs, tag = 'smem constant byte address 0x4 - core index']
  #allocation1 [shape = 'u32[144,128]{1,0:T(1,128)}', space=vmem, size = 0x12000, scoped, tag = 'internal scratch']
  #allocation2 [shape = 'f32[8,2]{1,0:T(8,128)}', space=vmem, size = 0x1000, scoped, tag = 'scratch operand']
  %s0 = inlined_call_operand.hbm [shape: bf16[8,2,32], index: 0, kind: input, shape index: {}]
  %s1 = inlined_call_operand.hbm [shape: f32[2,32], index: 1, kind: input, shape index: {}]
  %s2 = inlined_call_operand.hbm [shape: bf16[32,32], index: 2, kind: input, shape index: {}]
  %s3 = inlined_call_operand.vmem [shape: f32[1,32], index: 3, kind: input, shape index: {}]
  %s4 = inlined_call_operand.vmem [shape: f32[8,2], index: 4, kind: output, shape index: {}]
  %s5 = sld [smem:[#allocation0]]
  $region42: #{tpu_custom_call.1} parent=0
    _
  %s7 = ssub.s32 1, %s5
  %s8 = scalar_select 0, %s7, %s5
  $region1: #{tpu_custom_call.1} parent=0
    #allocation3 [shape = 'u8[4096]{0}', space=vmem, size = 0x1000, scoped, tag = 'input window, operand 0, single buffered']
    #allocation4 [shape = 's32[1]{0}', space=sflag, size = 0x4, scoped, tag = 'scoped memory for tpu_custom_call.1']
    #allocation5 [shape = 'u8[1024]{0}', space=vmem, size = 0x400, scoped, tag = 'input window, operand 1, single buffered']
    #allocation6 [shape = 's32[1]{0}', space=sflag, size = 0x4, scoped, tag = 'scoped memory for tpu_custom_call.1']
    #allocation7 [shape = 'u8[8192]{0}', space=vmem, size = 0x2000, scoped, tag = 'input window, operand 2, single buffered']
    %9 = vsyncpa [#allocation4], 0
    %10 = vsyncpa [#allocation6], 0
    // Predicated region
    $region2: #{tpu_custom_call.1} parent=1 // pred_check
      _
    $region3: #{tpu_custom_call.1} parent=1 // pred_check_branch
      %12 = sbr.rel (0) target = $region5
    $region4: #{tpu_custom_call.1} parent=1 // pred_region
      %s14 = ssub.s32 128, 128
      %15 = vsyncadd [#allocation4], %s14
      %s16 = sshll.u32 [#allocation3], 4
      %s17 = int_to_ptr.vmem [resolvable:$true] %s16
      %22 = dma.hbm_to_vmem [thread:$0]  %s0, 128, %s17, [#allocation4], 16, 16, 1
    $region5: #{tpu_custom_call.1} parent=1 // pred_fallthru
      _
    // Predicated region
    $region6: #{tpu_custom_call.1} parent=1 // pred_check
      _
    $region7: #{tpu_custom_call.1} parent=1 // pred_check_branch
      %24 = sbr.rel (0) target = $region9
    $region8: #{tpu_custom_call.1} parent=1 // pred_region
      %s26 = ssub.s32 32, 32
      %27 = vsyncadd [#allocation6], %s26
      %s29 = sshll.u32 [#allocation5], 4
      %s30 = int_to_ptr.vmem [resolvable:$true] %s29
      %32 = dma.hbm_to_vmem [thread:$0]  %s1, 32, %s30, [#allocation6]
    $region9: #{tpu_custom_call.1} parent=1 // pred_fallthru
      _
    // Predicated region
    $region10: #{tpu_custom_call.1} parent=1 // pred_check
      _
    $region11: #{tpu_custom_call.1} parent=1 // pred_check_branch
      %34 = sbr.rel (0) target = $region13
    $region12: #{tpu_custom_call.1} parent=1 // pred_region
      %s36 = ssub.s32 256, 256
      %37 = vsyncadd [#allocation6], %s36
      %s38 = sshll.u32 [#allocation7], 4
      %s39 = int_to_ptr.vmem [resolvable:$true] %s38
      %44 = dma.hbm_to_vmem [thread:$0]  %s2, 256, %s39, [#allocation6], 64, 64, 4
    $region13: #{tpu_custom_call.1} parent=1 // pred_fallthru
      _
    // Predicated region
    $region14: #{tpu_custom_call.1} parent=1 // pred_check
      _
    $region15: #{tpu_custom_call.1} parent=1 // pred_check_branch
      %46 = sbr.rel (0) target = $region17
    $region16: #{tpu_custom_call.1} parent=1 // pred_region
      _
    $region17: #{tpu_custom_call.1} parent=1 // pred_fallthru
      _
    // Predicated region
    $region18: #{tpu_custom_call.1} parent=1 // pred_check
      _
    $region19: #{tpu_custom_call.1} parent=1 // pred_check_branch
      %48 = sbr.rel (0) target = $region21
    $region20: #{tpu_custom_call.1} parent=1 // pred_region
      %49 = dma.done [#allocation4], 128
    $region21: #{tpu_custom_call.1} parent=1 // pred_fallthru
      _
    // Predicated region
    $region22: #{tpu_custom_call.1} parent=1 // pred_check
      _
    $region23: #{tpu_custom_call.1} parent=1 // pred_check_branch
      %51 = sbr.rel (0) target = $region25
    $region24: #{tpu_custom_call.1} parent=1 // pred_region
      %52 = dma.done [#allocation6], 32
    $region25: #{tpu_custom_call.1} parent=1 // pred_fallthru
      _
    // Predicated region
    $region26: #{tpu_custom_call.1} parent=1 // pred_check
      _
    $region27: #{tpu_custom_call.1} parent=1 // pred_check_branch
      %54 = sbr.rel (0) target = $region29
    $region28: #{tpu_custom_call.1} parent=1 // pred_region
      %55 = dma.done [#allocation6], 256
    $region29: #{tpu_custom_call.1} parent=1 // pred_fallthru
      _
    %v57 = vld [vmem:[#allocation3] sm:$0x1]
    %v58 = vld [vmem:[#allocation3 + $0x1] sm:$0x1]
    %v59 = vld [vmem:[#allocation3 + $0x2] sm:$0x1]
    %v60 = vld [vmem:[#allocation3 + $0x3] sm:$0x1]
    %v61 = vld [vmem:[#allocation3 + $0x4] sm:$0x1]
    %v62 = vld [vmem:[#allocation3 + $0x5] sm:$0x1]
    %v63 = vld [vmem:[#allocation3 + $0x6] sm:$0x1]
    %v64 = vld [vmem:[#allocation3 + $0x7] sm:$0x1]
    %v65 = vld [vmem:[#allocation7] sm:$0xf]
    %v66 = vld [vmem:[#allocation7 + $0x4] sm:$0xf]
    %v67 = vld [vmem:[#allocation7 + $0x8] sm:$0xf]
    %v68 = vld [vmem:[#allocation7 + $0xc] sm:$0xf]
    %v77 = vcombine.low %v57, %v58
    %v78 = vcombine.low %v59, %v60
    %v79 = vcombine.low %v61, %v62
    %v80 = vcombine.low %v63, %v64
    %v82 = vunpack.c.l.s4 1966171168
    %v83 = vunpack.c.0.s8 %v82
    %v84 = vlaneseq
    %v85 = vshrl.u32 %v84, 7
    %v86 = vsub.s32 %v83, %v85
    %v87 = vrot.slane %v77, %v86
    %v89 = vunpack.c.l.s4 1966171168
    %v90 = vunpack.c.0.s8 %v89
    %v91 = vlaneseq
    %v92 = vshrl.u32 %v91, 7
    %v93 = vsub.s32 %v90, %v92
    %v94 = vrot.slane %v78, %v93
    %v96 = vunpack.c.l.s4 1966171168
    %v97 = vunpack.c.0.s8 %v96
    %v98 = vlaneseq
    %v99 = vshrl.u32 %v98, 7
    %v100 = vsub.s32 %v97, %v99
    %v101 = vrot.slane %v79, %v100
    %v103 = vunpack.c.l.s4 1966171168
    %v104 = vunpack.c.0.s8 %v103
    %v105 = vlaneseq
    %v106 = vshrl.u32 %v105, 7
    %v107 = vsub.s32 %v104, %v106
    %v108 = vrot.slane %v80, %v107
    %v109 = vcombine.low %v87, %v94
    %v110 = vcombine.low %v101, %v108
    %v112 = vunpack.c.l.s4 1966171168
    %v113 = vunpack.c.0.s8 %v112
    %v114 = vlaneseq
    %v115 = vshrl.u32 %v114, 7
    %v116 = vsub.s32 %v113, %v115
    %v117 = vrot.slane %v109, %v116
    %v119 = vunpack.c.l.s4 1966171168
    %v120 = vunpack.c.0.s8 %v119
    %v121 = vlaneseq
    %v122 = vshrl.u32 %v121, 7
    %v123 = vsub.s32 %v120, %v122
    %v124 = vrot.slane %v110, %v123
    %v125 = vcombine.low %v117, %v124
    %v130 = vunpack.c.l.b16 %v65
    %v131 = vunpack.c.l.b16 %v66
    %v132 = vunpack.c.l.b16 %v67
    %v133 = vunpack.c.l.b16 %v68
    %v134 = vpack.c.b16 %v131, %v130
    %v135 = vpack.c.b16 %v133, %v132
    %vm138 = vcmask 261120
    %v140 = vsel %vm138, %v125, 0
    %142 = vmatprep.subr.bf16.mxu0 0
    %143 = vmatpush1.bf16.msra.mxu0 0
    %144 = vmatprep.subr.bf16.mxu0 0
    %145 = vmatpush1.bf16.msra.mxu0 0
    %146 = vmatprep.subr.bf16.mxu0 0
    %147 = vmatpush1.bf16.msra.mxu0 0
    %148 = vmatprep.subr.bf16.mxu0 0
    %149 = vmatpush1.bf16.msra.mxu0 0
    %150 = vmatprep.subr.bf16.mxu0 0
    %151 = vmatpush1.bf16.msra.mxu0 0
    %152 = vmatprep.subr.bf16.mxu0 0
    %153 = vmatpush1.bf16.msra.mxu0 0
    %154 = vmatprep.subr.bf16.mxu0 0
    %155 = vmatpush1.bf16.msra.mxu0 %v135
    %156 = vmatprep.subr.bf16.mxu0 0
    %157 = vmatpush1.bf16.msra.mxu0 %v134
    %158 = vmatprep.subr.bf16.mxu0 0
    %159 = vmatpush2.bf16.msra.mxu0 0
    %160 = vmatprep.subr.bf16.mxu0 0
    %161 = vmatpush2.bf16.msra.mxu0 0
    %162 = vmatprep.subr.bf16.mxu0 0
    %163 = vmatpush2.bf16.msra.mxu0 0
    %164 = vmatprep.subr.bf16.mxu0 0
    %165 = vmatpush2.bf16.msra.mxu0 0
    %166 = vmatprep.subr.bf16.mxu0 0
    %167 = vmatpush2.bf16.msra.mxu0 0
    %168 = vmatprep.subr.bf16.mxu0 0
    %169 = vmatpush2.bf16.msra.mxu0 0
    %170 = vmatprep.subr.bf16.mxu0 0
    %171 = vmatpush2.bf16.msra.mxu0 0
    %172 = vmatprep.subr.bf16.mxu0 0
    %173 = vmatpush2.bf16.msra.mxu0 0
    %174 = vmatprep.mubr.bf16.mxu0 0
    %175 = vmatmul.mubr.bf16.gmra.mxu0 %v140
    %v176 = vpop.f32.mrf.mxu0
    %v177 = vadd.f32 0.0, %v176
    %v178 = vpop.f32.mrf.mxu0
    %v179 = vpop.f32.mrf.mxu0
    %v180 = vadd.f32 0.0, %v179
    %v181 = vpop.f32.mrf.mxu0
    %182 = vdwg.mxu0
    %v185 = vcombine.high %v177, %v177
    %v187 = vunpack.c.l.s4 1983009808
    %v188 = vunpack.c.0.s8 %v187
    %v189 = vlaneseq
    %v190 = vshrl.u32 %v189, 7
    %v191 = vsub.s32 %v188, %v190
    %v192 = vrot.slane %v177, %v191
    %v194 = vunpack.c.l.s4 1983009808
    %v195 = vunpack.c.0.s8 %v194
    %v196 = vlaneseq
    %v197 = vshrl.u32 %v196, 7
    %v198 = vsub.s32 %v195, %v197
    %v199 = vrot.slane %v185, %v198
    %v200 = vcombine.high %v192, %v192
    %v201 = vcombine.high %v199, %v199
    %v202 = vcombine.high %v180, %v180
    %v204 = vunpack.c.l.s4 1983009808
    %v205 = vunpack.c.0.s8 %v204
    %v206 = vlaneseq
    %v207 = vshrl.u32 %v206, 7
    %v208 = vsub.s32 %v205, %v207
    %v209 = vrot.slane %v180, %v208
    %v211 = vunpack.c.l.s4 1983009808
    %v212 = vunpack.c.0.s8 %v211
    %v213 = vlaneseq
    %v214 = vshrl.u32 %v213, 7
    %v215 = vsub.s32 %v212, %v214
    %v216 = vrot.slane %v202, %v215
    %v217 = vcombine.high %v209, %v209
    %v218 = vcombine.high %v216, %v216
    %v227 = vld [vmem:[#allocation5] sm:$0x3]
    %v228 = vadd.f32 %v192, %v227
    %v229 = vadd.f32 %v200, %v227
    %v230 = vadd.f32 %v199, %v227
    %v231 = vadd.f32 %v201, %v227
    %v232 = vadd.f32 %v209, %v227
    %v233 = vadd.f32 %v217, %v227
    %v234 = vadd.f32 %v216, %v227
    %v235 = vadd.f32 %v218, %v227
    %v236 = vtanh.pop %v228
    %v237 = vtanh.pop %v229
    %v238 = vtanh.pop %v230
    %v239 = vtanh.pop %v231
    %v240 = vtanh.pop %v232
    %v241 = vtanh.pop %v233
    %v242 = vtanh.pop %v234
    %v243 = vtanh.pop %v235
    %v244 = vld [vmem:[%s3] sm:$0x1]
    %v246 = vlaneseq
    %v247 = vshrl.u32 %v246, 7
    %v248 = vsub.s32 0, %v247
    %v249 = vrot.slane %v244, %v248
    %v251 = vmul.f32 %v236, %v249
    %v252 = vmul.f32 %v237, %v249
    %v253 = vmul.f32 %v238, %v249
    %v254 = vmul.f32 %v239, %v249
    %v255 = vmul.f32 %v240, %v249
    %v256 = vmul.f32 %v241, %v249
    %v257 = vmul.f32 %v242, %v249
    %v258 = vmul.f32 %v243, %v249
    %vm259 = vcmask 254976
    %v260 = vsel %vm259, %v251, 0.0
    %261 = vadd.xlane.f32.xlu0 %v260
    %v262 = vpop.xlane.xlu0 %261
    %v263 = vsel %vm259, %v252, 0.0
    %264 = vadd.xlane.f32.xlu0 %v263
    %v265 = vpop.xlane.xlu0 %264
    %v266 = vsel %vm259, %v253, 0.0
    %267 = vadd.xlane.f32.xlu0 %v266
    %v268 = vpop.xlane.xlu0 %267
    %v269 = vsel %vm259, %v254, 0.0
    %270 = vadd.xlane.f32.xlu0 %v269
    %v271 = vpop.xlane.xlu0 %270
    %v272 = vsel %vm259, %v255, 0.0
    %273 = vadd.xlane.f32.xlu0 %v272
    %v274 = vpop.xlane.xlu0 %273
    %v275 = vsel %vm259, %v256, 0.0
    %276 = vadd.xlane.f32.xlu0 %v275
    %v277 = vpop.xlane.xlu0 %276
    %v278 = vsel %vm259, %v257, 0.0
    %279 = vadd.xlane.f32.xlu0 %v278
    %v280 = vpop.xlane.xlu0 %279
    %v281 = vsel %vm259, %v258, 0.0
    %282 = vadd.xlane.f32.xlu0 %v281
    %v283 = vpop.xlane.xlu0 %282
    %s284 = smul.u32 0, 8
    %v293 = vlaneseq
    %v294 = vand.u32 %v293, 127
    %v295 = vlaneseq
    %v296 = vshrl.u32 %v295, 7
    %v297 = vsub.s32 %v294, %v296
    %v298 = vrot.slane %v262, %v297
    %v299 = vlaneseq
    %v300 = vshrl.u32 %v299, 7
    %v301 = vsub.s32 %v294, %v300
    %v302 = vrot.slane %v265, %v301
    %v303 = vlaneseq
    %v304 = vshrl.u32 %v303, 7
    %v305 = vsub.s32 %v294, %v304
    %v306 = vrot.slane %v268, %v305
    %v307 = vlaneseq
    %v308 = vshrl.u32 %v307, 7
    %v309 = vsub.s32 %v294, %v308
    %v310 = vrot.slane %v271, %v309
    %v311 = vlaneseq
    %v312 = vshrl.u32 %v311, 7
    %v313 = vsub.s32 %v294, %v312
    %v314 = vrot.slane %v274, %v313
    %v315 = vlaneseq
    %v316 = vshrl.u32 %v315, 7
    %v317 = vsub.s32 %v294, %v316
    %v318 = vrot.slane %v277, %v317
    %v319 = vlaneseq
    %v320 = vshrl.u32 %v319, 7
    %v321 = vsub.s32 %v294, %v320
    %v322 = vrot.slane %v280, %v321
    %v323 = vlaneseq
    %v324 = vshrl.u32 %v323, 7
    %v325 = vsub.s32 %v294, %v324
    %v326 = vrot.slane %v283, %v325
    %vm327 = vcmask 1041409
    %v328 = vsel %vm327, %v302, %v298
    %vm329 = vcmask 1042434
    %v330 = vsel %vm329, %v306, %v328
    %vm331 = vcmask 1043459
    %v332 = vsel %vm331, %v310, %v330
    %vm333 = vcmask 1044484
    %v334 = vsel %vm333, %v314, %v332
    %vm335 = vcmask 1045509
    %v336 = vsel %vm335, %v318, %v334
    %vm337 = vcmask 1046534
    %v338 = vsel %vm337, %v322, %v336
    %vm339 = vcmask 1047559
    %v340 = vsel %vm339, %v326, %v338
    %s342 = scalar_lea.vmem [#allocation2], %s284
    %vm343 = vcmask 15360
    %344 = vst.msk [vmem:[%s342] sm:$0xff] %vm343, %v340
    %p345 = scmp.eq.s32.totalorder 0, 0
    // Predicated region
    $region30: #{tpu_custom_call.1} parent=1 // pred_check
      %p346 = pneg %p345
    $region31: #{tpu_custom_call.1} parent=1 // pred_check_branch
      %348 = sbr.rel (%p346) target = $region33
    $region32: #{tpu_custom_call.1} parent=1 // pred_region
      %v349 = vld [vmem:[#allocation2] sm:$0xff]
      %v350 = vsel %vm343, %v349, -inf
      %v351 = vrot.slane %v350, 4
      %v352 = vmax.f32 %v350, %v351
      %v353 = vrot.slane %v352, 2
      %v354 = vmax.f32 %v352, %v353
      %v355 = vrot.slane %v354, 1
      %v356 = vmax.f32 %v354, %v355
      %v357 = vsub.f32 %v349, %v356
      %v358 = vmul.f32 %v357, 1.442695
      %v359 = vpow.pop %v358
      %v360 = vsel %vm343, %v359, 0.0
      %v361 = vrot.slane %v360, 4
      %v362 = vadd.f32 %v360, %v361
      %v363 = vrot.slane %v362, 2
      %v364 = vadd.f32 %v362, %v363
      %v365 = vrot.slane %v364, 1
      %v366 = vadd.f32 %v364, %v365
      %v367 = vrcp.pop %v366
      %v368 = vmul.f32 %v359, %v367
      %369 = vst.msk [vmem:[%s4] sm:$0xff] %vm343, %v368
    $region33: #{tpu_custom_call.1} parent=1 // pred_fallthru
      _
    // Predicated region
    $region34: #{tpu_custom_call.1} parent=1 // pred_check
      _
    $region35: #{tpu_custom_call.1} parent=1 // pred_check_branch
      %371 = sbr.rel (0) target = $region37
    $region36: #{tpu_custom_call.1} parent=1 // pred_region
      _
    $region37: #{tpu_custom_call.1} parent=1 // pred_fallthru
      _
    // Predicated region
    $region38: #{tpu_custom_call.1} parent=1 // pred_check
      _
    $region39: #{tpu_custom_call.1} parent=1 // pred_check_branch
      %373 = sbr.rel (0) target = $region41
    $region40: #{tpu_custom_call.1} parent=1 // pred_region
      _
    $region41: #{tpu_custom_call.1} parent=1 // pred_fallthru
      _
    %374 = vsyncpa [#allocation4], 1
    %375 = vsyncpa [#allocation6], 1

</llo_original>
